<compile_context>
chip_gen: v6e
topology: v6e:2x2x1
jax: 0.10.0
libtpu: 0.0.40
codegen_flags: <defaults>
</compile_context>

<pallas_src>
import functools

import numpy as np
import jax
import jax.numpy as jnp
from jax.experimental import pallas as pl
from jax.experimental.pallas import tpu as pltpu

NEG_BIG = -9e15  # same non-edge mask value as the PyTorch reference


def _round_up(x, m):
    return (x + m - 1) // m * m


def _pad2d(arr, rows, cols):
    r, c = arr.shape
    return jnp.pad(arr, ((0, rows - r), (0, cols - c)))


# --------------------------------------------------------------- kernel A
def project_kernel(x_ref, w_ref, h_ref, f1_ref, f2_ref, *, f_out):
    # One MXU pass: res = x @ [W | W@a1 | W@a2 | 0]  (bf16 operands, f32 acc).
    res = jnp.dot(x_ref[...], w_ref[...], preferred_element_type=jnp.float32)
    h_ref[...] = res.astype(jnp.bfloat16)            # h (+ harmless padded cols)
    f1_ref[...] = res[:, f_out:f_out + 1]             # (TM, 1) f32
    f2_ref[...] = res[:, f_out + 1:f_out + 2]         # (TM, 1) f32


# --------------------------------------------------------------- kernel B
def attention_kernel(counts_ref, f1_ref, f2_ref, h_ref, adj_ref, o_ref,
                     m_sc, l_sc, acc_sc, *, alpha):
    i = pl.program_id(0)
    j = pl.program_id(1)

    @pl.when(j == 0)
    def _():
        m_sc[...] = jnp.full_like(m_sc, -jnp.inf)
        l_sc[...] = jnp.zeros_like(l_sc)
        acc_sc[...] = jnp.zeros_like(acc_sc)

    # Skip the whole tile when it has no edges (per-tile counts in SMEM).
    @pl.when(counts_ref[i, j] > 0)
    def _():
        # e[i, j] = leakyrelu([h_i || h_j] . a) = leakyrelu(f1_i + f2_j)
        logits = f1_ref[...] + f2_ref[...]            # (TM,1)+(1,TN) -> (TM,TN)
        e = jnp.maximum(logits, alpha * logits)       # LeakyReLU, single VALU op

        # Mask non-edges; adjacency arrives as int8 (compare directly, no widen).
        mask = adj_ref[...] > 0
        att = jnp.where(mask, e, NEG_BIG)

        # Online (flash-style) softmax update.
        m_prev = m_sc[...]
        m_new = jnp.maximum(m_prev, jnp.max(att, axis=1, keepdims=True))
        scale = jnp.exp(m_prev - m_new)
        p = jnp.exp(att - m_new)                      # (TM, TN) f32
        l_sc[...] = scale * l_sc[...] + jnp.sum(p, axis=1, keepdims=True)
        acc_sc[...] = scale * acc_sc[...] + jnp.dot(
            p.astype(jnp.bfloat16), h_ref[...],
            preferred_element_type=jnp.float32)
        m_sc[...] = m_new

    # TODO(synk): F.dropout on the attention matrix is omitted (eval-mode /
    # training=False semantics).

    @pl.when(j == pl.num_programs(1) - 1)
    def _():
        # Exact reciprocal (once per row tile, essentially free).
        l = l_sc[...]
        l_safe = jnp.where(l > 0.0, l, 1.0)           # guard fully-skipped rows
        h_prime = acc_sc[...] / l_safe
        # concat=True -> ELU
        o_ref[...] = jnp.where(h_prime > 0, h_prime, jnp.exp(h_prime) - 1.0)
        # TODO(synk): an isolated node (row with zero edges) falls back to 0 /
        # garbage here instead of PyTorch's uniform-softmax mean; with self
        # loops (as in GAT practice) this never surfaces.


# --------------------------------------------------------------- wrapper
def gat_forward(x, adj, W, a, *, alpha, block_n=256):
    N, F_in = x.shape
    F_out = W.shape[1]

    block_n = min(block_n, _round_up(N, 128))   # avoid over-padding tiny graphs
    F_in_pad = _round_up(F_in, 128)
    F_pad = _round_up(F_out + 2, 128)           # columns: h | f1 | f2 | zero pad
    N_pad = _round_up(N, block_n)
    n_t = N_pad // block_n

    # W_aug = [W | W@a1 | W@a2 | 0] so one MXU pass yields h, f1, f2.
    a1 = a[:F_out, :]                            # (F_out, 1)
    a2 = a[F_out:, :]                            # (F_out, 1)
    W_aug = jnp.concatenate([W, W @ a1, W @ a2], axis=1)
    W_aug = _pad2d(W_aug, F_in_pad, F_pad).astype(jnp.bfloat16)

    x_pad = _pad2d(x, N_pad, F_in_pad).astype(jnp.bfloat16)
    adj_i8 = _pad2d((adj > 0).astype(jnp.int8), N_pad, N_pad)

    # Per-tile edge counts for block-sparse skipping (scalar-prefetched to SMEM).
    tile_counts = adj_i8.astype(jnp.int32).reshape(
        n_t, block_n, n_t, block_n).sum(axis=(1, 3))

    # ---- kernel A: h (bf16), f1, f2 straight out of the projection ----------
    h_b, f1, f2_col = pl.pallas_call(
        functools.partial(project_kernel, f_out=F_out),
        out_shape=(
            jax.ShapeDtypeStruct((N_pad, F_pad), jnp.bfloat16),
            jax.ShapeDtypeStruct((N_pad, 1), jnp.float32),
            jax.ShapeDtypeStruct((N_pad, 1), jnp.float32),
        ),
        grid_spec=pltpu.PrefetchScalarGridSpec(
            num_scalar_prefetch=0,
            grid=(n_t,),
            in_specs=[
                pl.BlockSpec((block_n, F_in_pad), lambda i: (i, 0)),
                pl.BlockSpec((F_in_pad, F_pad), lambda i: (0, 0)),
            ],
            out_specs=[
                pl.BlockSpec((block_n, F_pad), lambda i: (i, 0)),
                pl.BlockSpec((block_n, 1), lambda i: (i, 0)),
                pl.BlockSpec((block_n, 1), lambda i: (i, 0)),
            ],
        ),
        compiler_params=pltpu.CompilerParams(
            dimension_semantics=("parallel",)),
    )(x_pad, W_aug)

    # Tiny (N_pad*4 bytes) relayout; everything big stays inside the kernels.
    f2 = f2_col.reshape(1, N_pad)

    # ---- kernel B: masked online softmax, attention @ h, ELU ----------------
    out = pl.pallas_call(
        functools.partial(attention_kernel, alpha=alpha),
        out_shape=jax.ShapeDtypeStruct((N_pad, F_pad), jnp.float32),
        grid_spec=pltpu.PrefetchScalarGridSpec(
            num_scalar_prefetch=1,
            grid=(n_t, n_t),
            in_specs=[
                pl.BlockSpec((block_n, 1), lambda i, j, c: (i, 0)),        # f1
                pl.BlockSpec((1, block_n), lambda i, j, c: (0, j)),        # f2
                pl.BlockSpec((block_n, F_pad), lambda i, j, c: (j, 0)),    # h
                pl.BlockSpec((block_n, block_n), lambda i, j, c: (i, j)),  # adj
            ],
            out_specs=pl.BlockSpec((block_n, F_pad), lambda i, j, c: (i, 0)),
            scratch_shapes=[
                pltpu.VMEM((block_n, 1), jnp.float32),      # running max
                pltpu.VMEM((block_n, 1), jnp.float32),      # running sum
                pltpu.VMEM((block_n, F_pad), jnp.float32),  # output accum
            ],
        ),
        compiler_params=pltpu.CompilerParams(
            dimension_semantics=("parallel", "arbitrary")),
    )(tile_counts, f1, f2, h_b, adj_i8)

    return out[:N, :F_out]


# --------------------------------------------------------------- references
def reference_forward_f32(x, adj, W, a, alpha):
    # Faithful f32 mirror of the PyTorch code (eval mode, no dropout).
    h = x @ W
    N = h.shape[0]
    a_input = jnp.concatenate(
        [jnp.repeat(h, N, axis=0), jnp.tile(h, (N, 1))], axis=1
    ).reshape(N, N, 2 * h.shape[1])
    logits = (a_input @ a)[..., 0]
    e = jnp.where(logits > 0, logits, alpha * logits)
    att = jnp.where(adj > 0, e, jnp.full_like(e, NEG_BIG))
    att = jax.nn.softmax(att, axis=1)
    h_prime = att @ h
    return jnp.where(h_prime > 0, h_prime, jnp.exp(h_prime) - 1.0)


def reference_forward_matched(x, adj, W, a, alpha):
    # Same math, but mirroring the kernel's bf16 matmul-operand casts.
    F_out = W.shape[1]
    a1, a2 = a[:F_out, :], a[F_out:, :]
    W_aug = jnp.concatenate([W, W @ a1, W @ a2], axis=1)
    h_aug = jnp.dot(x.astype(jnp.bfloat16), W_aug.astype(jnp.bfloat16),
                    preferred_element_type=jnp.float32)
    h, f1, f2 = h_aug[:, :F_out], h_aug[:, F_out], h_aug[:, F_out + 1]
    logits = f1[:, None] + f2[None, :]
    e = jnp.where(logits > 0, logits, alpha * logits)
    att = jnp.where(adj > 0, e, jnp.full_like(e, NEG_BIG))
    att = jax.nn.softmax(att, axis=1)
    h_prime = jnp.dot(att.astype(jnp.bfloat16), h.astype(jnp.bfloat16),
                      preferred_element_type=jnp.float32)
    return jnp.where(h_prime > 0, h_prime, jnp.exp(h_prime) - 1.0)


def xavier_uniform(key, shape, gain):
    fan_in, fan_out = shape[0], shape[1]
    bound = gain * np.sqrt(6.0 / (fan_in + fan_out))
    return jax.random.uniform(key, shape, minval=-bound, maxval=bound,
                              dtype=jnp.float32)


if __name__ == "__main__":
    # Small synthetic graph (non-multiple-of-tile sizes to exercise padding).
    N = 300
    in_features = 72
    out_features = 48
    alpha = 0.2          # LeakyReLU negative slope
    dropout = 0.6        # unused (eval mode)

    key = jax.random.PRNGKey(0)
    k_x, k_adj, k_w, k_a = jax.random.split(key, 4)

    x = jax.random.normal(k_x, (N, in_features), dtype=jnp.float32)

    # Random sparse-ish adjacency with self loops, as a float matrix.
    adj_rand = jax.random.uniform(k_adj, (N, N))
    adj = (adj_rand > 0.7).astype(jnp.float32)
    adj = jnp.maximum(adj, jnp.eye(N, dtype=jnp.float32))

    gain = np.sqrt(2.0)
    W = xavier_uniform(k_w, (in_features, out_features), gain)
    a = xavier_uniform(k_a, (2 * out_features, 1), gain)

    out = gat_forward(x, adj, W, a, alpha=alpha)
    out = jax.block_until_ready(out)
    out_np = np.asarray(out)

    # Tight check against a reference with the same bf16 matmul-operand casts
    # (validates tiling / tile skipping / online softmax / masking / ELU).
    ref_matched = np.asarray(reference_forward_matched(x, adj, W, a, alpha))
    np.testing.assert_allclose(out_np, ref_matched, rtol=2e-2, atol=2e-2)

    # Loose sanity check against the faithful f32 reference (bf16 MXU inputs
    # necessarily loosen this bound).
    ref_f32 = np.asarray(reference_forward_f32(x, adj, W, a, alpha))
    np.testing.assert_allclose(out_np, ref_f32, rtol=1e-1, atol=1e-1)

    print("KERNEL_OK")
</pallas_src>

<mosaic_0001>
module attributes {stable_mosaic.version = 11 : i64} {
  func.func @project_kernel(%arg0: i32, %arg1: memref<256x128xbf16, #tpu.memory_space<vmem>>, %arg2: memref<128x128xbf16, #tpu.memory_space<vmem>>, %arg3: memref<256x128xbf16, #tpu.memory_space<vmem>>, %arg4: memref<256x1xf32, #tpu.memory_space<vmem>>, %arg5: memref<256x1xf32, #tpu.memory_space<vmem>>) attributes {dimension_semantics = [#tpu.dimension_semantics<parallel>], iteration_bounds = array<i64: 2>, scalar_prefetch = 0 : i64, scratch_operands = 0 : i64, tpu.core_type = #tpu.core_type<tc>, window_params = [{transform_indices = @transform_0, window_bounds = array<i64: 256, 128>}, {pipeline_mode = #tpu.pipeline_mode<synchronous>, transform_indices = @transform_1, window_bounds = array<i64: 128, 128>}, {transform_indices = @transform_2, window_bounds = array<i64: 256, 128>}, {transform_indices = @transform_3, window_bounds = array<i64: 256, 1>}, {transform_indices = @transform_4, window_bounds = array<i64: 256, 1>}]} {
    %c0 = arith.constant 0 : index
    %c0_0 = arith.constant 0 : index
    %0 = vector.load %arg1[%c0, %c0_0] : memref<256x128xbf16, #tpu.memory_space<vmem>>, vector<256x128xbf16>
    %c0_1 = arith.constant 0 : index
    %c0_2 = arith.constant 0 : index
    %1 = vector.load %arg2[%c0_1, %c0_2] : memref<128x128xbf16, #tpu.memory_space<vmem>>, vector<128x128xbf16>
    %cst = arith.constant dense<0.000000e+00> : vector<256x128xf32>
    %2 = tpu.matmul %0, %1, %cst {dimension_numbers = #tpu.dot_dimension_numbers<[1], [0], [0], [1], [0, 0, 1, 1], [], []>} : vector<256x128xbf16>, vector<128x128xbf16>, vector<256x128xf32> -> vector<256x128xf32>
    %3 = arith.truncf %2 : vector<256x128xf32> to vector<256x128xbf16>
    %c0_3 = arith.constant 0 : index
    %c0_4 = arith.constant 0 : index
    %4 = vector.load %arg3[%c0_3, %c0_4] : memref<256x128xbf16, #tpu.memory_space<vmem>>, vector<256x128xbf16>
    tpu.vector_store %arg3[%c0_3, %c0_4], %3 {strides = array<i32>} : memref<256x128xbf16, #tpu.memory_space<vmem>>, vector<256x128xbf16>,
    %5 = vector.extract_strided_slice %2 {offsets = [0, 48], sizes = [256, 1], strides = [1, 1]} : vector<256x128xf32> to vector<256x1xf32>
    %c0_5 = arith.constant 0 : index
    %c0_6 = arith.constant 0 : index
    %6 = vector.load %arg4[%c0_5, %c0_6] : memref<256x1xf32, #tpu.memory_space<vmem>>, vector<256x1xf32>
    tpu.vector_store %arg4[%c0_5, %c0_6], %5 {strides = array<i32>} : memref<256x1xf32, #tpu.memory_space<vmem>>, vector<256x1xf32>,
    %7 = vector.extract_strided_slice %2 {offsets = [0, 49], sizes = [256, 1], strides = [1, 1]} : vector<256x128xf32> to vector<256x1xf32>
    %c0_7 = arith.constant 0 : index
    %c0_8 = arith.constant 0 : index
    %8 = vector.load %arg5[%c0_7, %c0_8] : memref<256x1xf32, #tpu.memory_space<vmem>>, vector<256x1xf32>
    tpu.vector_store %arg5[%c0_7, %c0_8], %7 {strides = array<i32>} : memref<256x1xf32, #tpu.memory_space<vmem>>, vector<256x1xf32>,
    return
  }
  func.func @transform_0(%arg0: i32) -> (i32, i32) {
    %c0_i32 = arith.constant 0 : i32
    %c0_i32_0 = arith.constant 0 : i32
    return %arg0, %c0_i32 : i32, i32
  }
  func.func @transform_1(%arg0: i32) -> (i32, i32) {
    %c0_i32 = arith.constant 0 : i32
    %c0_i32_0 = arith.constant 0 : i32
    %c0_i32_1 = arith.constant 0 : i32
    return %c0_i32, %c0_i32_0 : i32, i32
  }
  func.func @transform_2(%arg0: i32) -> (i32, i32) {
    %c0_i32 = arith.constant 0 : i32
    %c0_i32_0 = arith.constant 0 : i32
    return %arg0, %c0_i32 : i32, i32
  }
  func.func @transform_3(%arg0: i32) -> (i32, i32) {
    %c0_i32 = arith.constant 0 : i32
    %c0_i32_0 = arith.constant 0 : i32
    return %arg0, %c0_i32 : i32, i32
  }
  func.func @transform_4(%arg0: i32) -> (i32, i32) {
    %c0_i32 = arith.constant 0 : i32
    %c0_i32_0 = arith.constant 0 : i32
    return %arg0, %c0_i32 : i32, i32
  }
}

</mosaic_0001>

<llo_original>
// kernel: tpu_custom_call.1
$region0: #{tpu_custom_call.1}
  #allocation0 [shape = 'u32[]', space=smem, size = 0x4, offset = 0x4, fixed_abs, tag = 'smem constant byte address 0x4 - core index']
  #allocation1 [shape = 'u32[144,128]{1,0:T(1,128)}', space=vmem, size = 0x12000, scoped, tag = 'internal scratch']
  %s0 = inlined_call_operand.hbm [shape: bf16[512,128], index: 0, kind: input, shape index: {}]
  %s1 = inlined_call_operand.hbm [shape: bf16[128,128], index: 1, kind: input, shape index: {}]
  %s2 = inlined_call_operand.hbm [shape: bf16[512,128], index: 2, kind: output, shape index: {0}]
  %s3 = inlined_call_operand.vmem [shape: f32[512,1], index: 3, kind: output, shape index: {1}]
  %s4 = inlined_call_operand.vmem [shape: f32[512,1], index: 4, kind: output, shape index: {2}]
  %5 = xla_tuple %s2, %s3, %s4
  %s6 = sld [smem:[#allocation0]]
  $region65: #{tpu_custom_call.1} parent=0
    _
  %s8 = ssub.s32 1, %s6
  %s9 = scalar_select 0, %s8, %s6
  $region1: #{tpu_custom_call.1} parent=0
    #allocation2 [shape = 'u8[131072]{0}', space=vmem, size = 0x20000, scoped, tag = 'input window, operand 0']
    #allocation3 [shape = 's32[2]{0}', space=sflag, size = 0x8, scoped, tag = 'scoped memory for tpu_custom_call.1']
    #allocation4 [shape = 's32[2]{0}', space=sflag, size = 0x8, scoped, tag = 'scoped memory for tpu_custom_call.1']
    #allocation5 [shape = 'u8[32768]{0}', space=vmem, size = 0x8000, scoped, tag = 'input window, operand 1, single buffered']
    #allocation6 [shape = 's32[1]{0}', space=sflag, size = 0x4, scoped, tag = 'scoped memory for tpu_custom_call.1']
    #allocation7 [shape = 'u8[131072]{0}', space=vmem, size = 0x20000, scoped, tag = 'output window, operand 0']
    %10 = vsyncpa [#allocation3], 0
    %s11 = scalar_lea.sflag [#allocation3], 1
    %12 = vsyncpa %s11, 0
    %13 = vsyncpa [#allocation6], 0
    %14 = vsyncpa [#allocation4], 0
    %s15 = scalar_lea.sflag [#allocation4], 1
    %16 = vsyncpa %s15, 0
    loop: start=0, step=1, limit=4
    $region2: #{tpu_custom_call.1} parent=1 // loop_pre_header
      _
    $region3: #{tpu_custom_call.1} parent=1 // loop_header
      %s18 = sphi 0, %s22
      %p19 = scmp.ge.s32.totalorder %s18, 4
      %s28 = sphi 0, %s30
      %s31 = sphi 0, %s28
      %s32 = sphi 0, %s31
      %s48 = sphi 0, %s32
      %s52 = sphi 0, %s52
      %s54 = sphi 0, %s52
      %s55 = sphi 0, %s54
      %s69 = sphi 0, %s55
      %s75 = sphi 0, %s77
      %s78 = sphi 0, %s75
      %s79 = sphi 0, %s78
      %s95 = sphi 0, %s79
      %s101 = sphi 0, %s103
      %s104 = sphi 0, %s101
      %s105 = sphi 0, %s104
      %s121 = sphi 0, %s105
      %s127 = sphi 0, %s129
      %s130 = sphi 0, %s127
      %s131 = sphi 0, %s130
      %s147 = sphi 0, %s131
    $region4: #{tpu_custom_call.1} parent=1 // loop_header_branch
      %21 = sbr.rel (%p19) target = $region8
    $region5: #{tpu_custom_call.1} parent=1 // loop_body
      %s23 = ssub.s32 %s18, 1
      %s24 = ssub.s32 %s18, 2
      %s25 = sadd.s32 %s18, 1
      %s26 = ssub.s32 %s18, %s25
      %p27 = scmp.eq.s32.totalorder %s26, 0
      %s29 = sadd.s32 %s28, 1
      %s30 = scalar_select %p27, %s28, %s29
      %p33 = pneg %p27
      %p34 = scmp.eq.s32.totalorder %s18, 1
      %p35 = por %p33, %p34
      %p36 = scmp.ne.s32.totalorder %s28, %s31
      %p37 = scmp.eq.s32.totalorder %s18, 0
      %p38 = por %p36, %p37
      %p39 = scmp.ne.s32.totalorder %s28, %s31
      %p40 = scmp.eq.s32.totalorder %s23, 1
      %p41 = por %p39, %p40
      %p42 = scmp.ne.s32.totalorder %s31, %s32
      %p43 = scmp.eq.s32.totalorder %s23, 0
      %p44 = por %p42, %p43
      %p45 = scmp.ne.s32.totalorder %s31, %s32
      %p46 = scmp.eq.s32.totalorder %s24, 1
      %p47 = por %p45, %p46
      %p49 = scmp.ne.s32.totalorder %s32, %s48
      %p50 = scmp.eq.s32.totalorder %s24, 0
      %p51 = por %p49, %p50
      %s53 = sadd.s32 %s52, 1
      %p56 = scmp.eq.s32.totalorder %s18, 1
      %p57 = scmp.ne.s32.totalorder %s52, %s54
      %p58 = scmp.eq.s32.totalorder %s18, 0
      %p59 = por %p57, %p58
      %p60 = scmp.ne.s32.totalorder %s52, %s54
      %p61 = scmp.eq.s32.totalorder %s23, 1
      %p62 = por %p60, %p61
      %p63 = scmp.ne.s32.totalorder %s54, %s55
      %p64 = scmp.eq.s32.totalorder %s23, 0
      %p65 = por %p63, %p64
      %p66 = scmp.ne.s32.totalorder %s54, %s55
      %p67 = scmp.eq.s32.totalorder %s24, 1
      %p68 = por %p66, %p67
      %p70 = scmp.ne.s32.totalorder %s55, %s69
      %p71 = scmp.eq.s32.totalorder %s24, 0
      %p72 = por %p70, %p71
      %s73 = ssub.s32 %s18, %s25
      %p74 = scmp.eq.s32.totalorder %s73, 0
      %s76 = sadd.s32 %s75, 1
      %s77 = scalar_select %p74, %s75, %s76
      %p80 = pneg %p74
      %p81 = scmp.eq.s32.totalorder %s18, 1
      %p82 = por %p80, %p81
      %p83 = scmp.ne.s32.totalorder %s75, %s78
      %p84 = scmp.eq.s32.totalorder %s18, 0
      %p85 = por %p83, %p84
      %p86 = scmp.ne.s32.totalorder %s75, %s78
      %p87 = scmp.eq.s32.totalorder %s23, 1
      %p88 = por %p86, %p87
      %p89 = scmp.ne.s32.totalorder %s78, %s79
      %p90 = scmp.eq.s32.totalorder %s23, 0
      %p91 = por %p89, %p90
      %p92 = scmp.ne.s32.totalorder %s78, %s79
      %p93 = scmp.eq.s32.totalorder %s24, 1
      %p94 = por %p92, %p93
      %p96 = scmp.ne.s32.totalorder %s79, %s95
      %p97 = scmp.eq.s32.totalorder %s24, 0
      %p98 = por %p96, %p97
      %s99 = ssub.s32 %s18, %s25
      %p100 = scmp.eq.s32.totalorder %s99, 0
      %s102 = sadd.s32 %s101, 1
      %s103 = scalar_select %p100, %s101, %s102
      %p106 = pneg %p100
      %p107 = scmp.eq.s32.totalorder %s18, 1
      %p108 = por %p106, %p107
      %p109 = scmp.ne.s32.totalorder %s101, %s104
      %p110 = scmp.eq.s32.totalorder %s18, 0
      %p111 = por %p109, %p110
      %p112 = scmp.ne.s32.totalorder %s101, %s104
      %p113 = scmp.eq.s32.totalorder %s23, 1
      %p114 = por %p112, %p113
      %p115 = scmp.ne.s32.totalorder %s104, %s105
      %p116 = scmp.eq.s32.totalorder %s23, 0
      %p117 = por %p115, %p116
      %p118 = scmp.ne.s32.totalorder %s104, %s105
      %p119 = scmp.eq.s32.totalorder %s24, 1
      %p120 = por %p118, %p119
      %p122 = scmp.ne.s32.totalorder %s105, %s121
      %p123 = scmp.eq.s32.totalorder %s24, 0
      %p124 = por %p122, %p123
      %s125 = ssub.s32 %s18, %s25
      %p126 = scmp.eq.s32.totalorder %s125, 0
      %s128 = sadd.s32 %s127, 1
      %s129 = scalar_select %p126, %s127, %s128
      %p132 = pneg %p126
      %p133 = scmp.eq.s32.totalorder %s18, 1
      %p134 = por %p132, %p133
      %p135 = scmp.ne.s32.totalorder %s127, %s130
      %p136 = scmp.eq.s32.totalorder %s18, 0
      %p137 = por %p135, %p136
      %p138 = scmp.ne.s32.totalorder %s127, %s130
      %p139 = scmp.eq.s32.totalorder %s23, 1
      %p140 = por %p138, %p139
      %p141 = scmp.ne.s32.totalorder %s130, %s131
      %p142 = scmp.eq.s32.totalorder %s23, 0
      %p143 = por %p141, %p142
      %p144 = scmp.ne.s32.totalorder %s130, %s131
      %p145 = scmp.eq.s32.totalorder %s24, 1
      %p146 = por %p144, %p145
      %p148 = scmp.ne.s32.totalorder %s131, %s147
      %p149 = scmp.eq.s32.totalorder %s24, 0
      %p150 = por %p148, %p149
      %p151 = scmp.le.s32.totalorder 1, %s18
      %p152 = scmp.lt.s32.totalorder %s18, 3
      %p153 = pnand %p151, %p152
      %p154 = pneg %p153
      // Predicated region
      $region9: #{tpu_custom_call.1} parent=5 // pred_check
        _
      $region10: #{tpu_custom_call.1} parent=5 // pred_check_branch
        %156 = sbr.rel (%p153) target = $region12
      $region11: #{tpu_custom_call.1} parent=5 // pred_region
        %s157 = ssub.s32 %s18, 1
        // Predicated region
        $region13: #{tpu_custom_call.1} parent=11 // pred_check
          %p158 = pneg %p65
        $region14: #{tpu_custom_call.1} parent=11 // pred_check_branch
          %160 = sbr.rel (%p158) target = $region16
        $region15: #{tpu_custom_call.1} parent=11 // pred_region
          %s162 = ssub.s32 1024, 1024
          %163 = vsyncadd [#allocation6], %s162
          %s164 = sshll.u32 [#allocation5], 4
          %s165 = int_to_ptr.vmem [resolvable:$true] %s164
          %170 = dma.hbm_to_vmem [thread:$0]  %s1, 1024, %s165, [#allocation6], 64, 64, 4
        $region16: #{tpu_custom_call.1} parent=11 // pred_fallthru
          _
      $region12: #{tpu_custom_call.1} parent=5 // pred_fallthru
        _
      %p171 = scmp.lt.s32.totalorder %s18, 2
      // Predicated region
      $region17: #{tpu_custom_call.1} parent=5 // pred_check
        %p172 = pneg %p171
      $region18: #{tpu_custom_call.1} parent=5 // pred_check_branch
        %174 = sbr.rel (%p172) target = $region20
      $region19: #{tpu_custom_call.1} parent=5 // pred_region
        // Predicated region
        $region21: #{tpu_custom_call.1} parent=19 // pred_check
          %p175 = pneg %p38
        $region22: #{tpu_custom_call.1} parent=19 // pred_check_branch
          %177 = sbr.rel (%p175) target = $region24
        $region23: #{tpu_custom_call.1} parent=19 // pred_region
          %s178 = sand.u32 %s28, 1
          %s179 = scalar_lea.sflag [#allocation3], %s178
          %s180 = sand.u32 %s28, 1
          %s181 = smul.addr %s180, 128
          %s182 = scalar_lea.vmem [#allocation2], %s181
          %s183 = smul.u32 32, %s18
          %s185 = ssub.s32 2048, 2048
          %186 = vsyncadd %s179, %s185
          %s187 = smul.addr %s183, 64
          %s188 = scalar_lea.hbm %s0, %s187
          %s189 = sshll.u32 %s182, 4
          %s190 = int_to_ptr.vmem [resolvable:$true] %s189
          %195 = dma.hbm_to_vmem [thread:$0]  %s188, 2048, %s190, %s179, 64, 64, 4
        $region24: #{tpu_custom_call.1} parent=19 // pred_fallthru
          _
      $region20: #{tpu_custom_call.1} parent=5 // pred_fallthru
        _
      %p196 = scmp.le.s32.totalorder 1, %s18
      %p197 = scmp.lt.s32.totalorder %s18, 3
      %p198 = pnand %p196, %p197
      %p199 = pneg %p198
      // Predicated region
      $region25: #{tpu_custom_call.1} parent=5 // pred_check
        _
      $region26: #{tpu_custom_call.1} parent=5 // pred_check_branch
        %201 = sbr.rel (%p198) target = $region28
      $region27: #{tpu_custom_call.1} parent=5 // pred_region
        %s202 = ssub.s32 %s18, 1
        %s203 = sand.u32 %s31, 1
        %s204 = scalar_lea.sflag [#allocation3], %s203
        %s205 = sand.u32 %s31, 1
        %s206 = smul.addr %s205, 128
        %s207 = scalar_lea.vmem [#allocation2], %s206
        // Predicated region
        $region29: #{tpu_custom_call.1} parent=27 // pred_check
          %p208 = pneg %p44
        $region30: #{tpu_custom_call.1} parent=27 // pred_check_branch
          %210 = sbr.rel (%p208) target = $region32
        $region31: #{tpu_custom_call.1} parent=27 // pred_region
          %211 = dma.done %s204, 2048
        $region32: #{tpu_custom_call.1} parent=27 // pred_fallthru
          _
        // Predicated region
        $region33: #{tpu_custom_call.1} parent=27 // pred_check
          %p212 = pneg %p65
        $region34: #{tpu_custom_call.1} parent=27 // pred_check_branch
          %214 = sbr.rel (%p212) target = $region36
        $region35: #{tpu_custom_call.1} parent=27 // pred_region
          %215 = dma.done [#allocation6], 1024
        $region36: #{tpu_custom_call.1} parent=27 // pred_fallthru
          _
        %s216 = sand.u32 %s31, 1
        %s217 = scalar_lea.sflag [#allocation3], %s216
        %s218 = sand.u32 %s31, 1
        %s219 = smul.addr %s218, 128
        %s220 = scalar_lea.vmem [#allocation2], %s219
        %p221 = pneg %p44
        %p222 = pneg %p41
        %p223 = pneg %p65
        %p224 = pneg %p62
        %p225 = pneg %p91
        %p226 = pneg %p88
        %s227 = sand.u32 %s78, 1
        %s228 = scalar_lea.sflag [#allocation4], %s227
        %s229 = sand.u32 %s78, 1
        %s230 = smul.addr %s229, 128
        %s231 = scalar_lea.vmem [#allocation7], %s230
        %p232 = pneg %p117
        %p233 = pneg %p114
        %s234 = smul.u32 32, %s23
        %p235 = scmp.lt.s32.totalorder %s234, 63
        %s236 = scalar_select %p235, %s234, 63
        %s237 = smul.addr %s236, 8
        %s238 = scalar_lea.vmem %s3, %s237
        %p239 = pneg %p143
        %p240 = pneg %p140
        %s241 = smul.u32 32, %s23
        %p242 = scmp.lt.s32.totalorder %s241, 63
        %s243 = scalar_select %p242, %s241, 63
        %s244 = smul.addr %s243, 8
        %s245 = scalar_lea.vmem %s4, %s244
        %s246 = smul.u32 32, %s23
        %s247 = smul.u32 32, %s23
        %s248 = smul.u32 32, %s23
        %p249 = scmp.lt.s32.totalorder %s248, 63
        %s250 = scalar_select %p249, %s248, 63
        %s251 = smul.addr %s250, 8
        %s252 = scalar_lea.vmem %s3, %s251
        %s253 = smul.u32 32, %s23
        %s254 = smul.u32 32, %s23
        %p255 = scmp.lt.s32.totalorder %s254, 63
        %s256 = scalar_select %p255, %s254, 63
        %s257 = smul.addr %s256, 8
        %s258 = scalar_lea.vmem %s4, %s257
        %s259 = smul.u32 32, %s23
        %v261 = vld [vmem:[%s207] sm:$0xf]
        %v262 = vld [vmem:[%s207 + $0x4] sm:$0xf]
        %v263 = vld [vmem:[%s207 + $0x8] sm:$0xf]
        %v264 = vld [vmem:[%s207 + $0xc] sm:$0xf]
        %v265 = vld [vmem:[%s207 + $0x10] sm:$0xf]
        %v266 = vld [vmem:[%s207 + $0x14] sm:$0xf]
        %v267 = vld [vmem:[%s207 + $0x18] sm:$0xf]
        %v268 = vld [vmem:[%s207 + $0x1c] sm:$0xf]
        %v269 = vld [vmem:[%s207 + $0x20] sm:$0xf]
        %v270 = vld [vmem:[%s207 + $0x24] sm:$0xf]
        %v271 = vld [vmem:[%s207 + $0x28] sm:$0xf]
        %v272 = vld [vmem:[%s207 + $0x2c] sm:$0xf]
        %v273 = vld [vmem:[%s207 + $0x30] sm:$0xf]
        %v274 = vld [vmem:[%s207 + $0x34] sm:$0xf]
        %v275 = vld [vmem:[%s207 + $0x38] sm:$0xf]
        %v276 = vld [vmem:[%s207 + $0x3c] sm:$0xf]
        %v277 = vld [vmem:[%s207 + $0x40] sm:$0xf]
        %v278 = vld [vmem:[%s207 + $0x44] sm:$0xf]
        %v279 = vld [vmem:[%s207 + $0x48] sm:$0xf]
        %v280 = vld [vmem:[%s207 + $0x4c] sm:$0xf]
        %v281 = vld [vmem:[%s207 + $0x50] sm:$0xf]
        %v282 = vld [vmem:[%s207 + $0x54] sm:$0xf]
        %v283 = vld [vmem:[%s207 + $0x58] sm:$0xf]
        %v284 = vld [vmem:[%s207 + $0x5c] sm:$0xf]
        %v285 = vld [vmem:[%s207 + $0x60] sm:$0xf]
        %v286 = vld [vmem:[%s207 + $0x64] sm:$0xf]
        %v287 = vld [vmem:[%s207 + $0x68] sm:$0xf]
        %v288 = vld [vmem:[%s207 + $0x6c] sm:$0xf]
        %v289 = vld [vmem:[%s207 + $0x70] sm:$0xf]
        %v290 = vld [vmem:[%s207 + $0x74] sm:$0xf]
        %v291 = vld [vmem:[%s207 + $0x78] sm:$0xf]
        %v292 = vld [vmem:[%s207 + $0x7c] sm:$0xf]
        %v293 = vld [vmem:[#allocation5] sm:$0xf]
        %v294 = vld [vmem:[#allocation5 + $0x4] sm:$0xf]
        %v295 = vld [vmem:[#allocation5 + $0x8] sm:$0xf]
        %v296 = vld [vmem:[#allocation5 + $0xc] sm:$0xf]
        %v297 = vld [vmem:[#allocation5 + $0x10] sm:$0xf]
        %v298 = vld [vmem:[#allocation5 + $0x14] sm:$0xf]
        %v299 = vld [vmem:[#allocation5 + $0x18] sm:$0xf]
        %v300 = vld [vmem:[#allocation5 + $0x1c] sm:$0xf]
        %v301 = vld [vmem:[#allocation5 + $0x20] sm:$0xf]
        %v302 = vld [vmem:[#allocation5 + $0x24] sm:$0xf]
        %v303 = vld [vmem:[#allocation5 + $0x28] sm:$0xf]
        %v304 = vld [vmem:[#allocation5 + $0x2c] sm:$0xf]
        %v305 = vld [vmem:[#allocation5 + $0x30] sm:$0xf]
        %v306 = vld [vmem:[#allocation5 + $0x34] sm:$0xf]
        %v307 = vld [vmem:[#allocation5 + $0x38] sm:$0xf]
        %v308 = vld [vmem:[#allocation5 + $0x3c] sm:$0xf]
        %v341 = vunpack.c.l.b16 %v261
        %v342 = vunpack.c.l.b16 %v262
        %v343 = vunpack.c.l.b16 %v263
        %v344 = vunpack.c.l.b16 %v264
        %v345 = vunpack.c.l.b16 %v265
        %v346 = vunpack.c.l.b16 %v266
        %v347 = vunpack.c.l.b16 %v267
        %v348 = vunpack.c.l.b16 %v268
        %v349 = vunpack.c.l.b16 %v269
        %v350 = vunpack.c.l.b16 %v270
        %v351 = vunpack.c.l.b16 %v271
        %v352 = vunpack.c.l.b16 %v272
        %v353 = vunpack.c.l.b16 %v273
        %v354 = vunpack.c.l.b16 %v274
        %v355 = vunpack.c.l.b16 %v275
        %v356 = vunpack.c.l.b16 %v276
        %v357 = vunpack.c.l.b16 %v277
        %v358 = vunpack.c.l.b16 %v278
        %v359 = vunpack.c.l.b16 %v279
        %v360 = vunpack.c.l.b16 %v280
        %v361 = vunpack.c.l.b16 %v281
        %v362 = vunpack.c.l.b16 %v282
        %v363 = vunpack.c.l.b16 %v283
        %v364 = vunpack.c.l.b16 %v284
        %v365 = vunpack.c.l.b16 %v285
        %v366 = vunpack.c.l.b16 %v286
        %v367 = vunpack.c.l.b16 %v287
        %v368 = vunpack.c.l.b16 %v288
        %v369 = vunpack.c.l.b16 %v289
        %v370 = vunpack.c.l.b16 %v290
        %v371 = vunpack.c.l.b16 %v291
        %v372 = vunpack.c.l.b16 %v292
        %v373 = vpack.c.b16 %v342, %v341
        %v374 = vpack.c.b16 %v344, %v343
        %v375 = vpack.c.b16 %v346, %v345
        %v376 = vpack.c.b16 %v348, %v347
        %v377 = vpack.c.b16 %v350, %v349
        %v378 = vpack.c.b16 %v352, %v351
        %v379 = vpack.c.b16 %v354, %v353
        %v380 = vpack.c.b16 %v356, %v355
        %v381 = vpack.c.b16 %v358, %v357
        %v382 = vpack.c.b16 %v360, %v359
        %v383 = vpack.c.b16 %v362, %v361
        %v384 = vpack.c.b16 %v364, %v363
        %v385 = vpack.c.b16 %v366, %v365
        %v386 = vpack.c.b16 %v368, %v367
        %v387 = vpack.c.b16 %v370, %v369
        %v388 = vpack.c.b16 %v372, %v371
        %v421 = vunpack.c.l.b16 %v293
        %v422 = vunpack.c.l.b16 %v294
        %v423 = vunpack.c.l.b16 %v295
        %v424 = vunpack.c.l.b16 %v296
        %v425 = vunpack.c.l.b16 %v297
        %v426 = vunpack.c.l.b16 %v298
        %v427 = vunpack.c.l.b16 %v299
        %v428 = vunpack.c.l.b16 %v300
        %v429 = vunpack.c.l.b16 %v301
        %v430 = vunpack.c.l.b16 %v302
        %v431 = vunpack.c.l.b16 %v303
        %v432 = vunpack.c.l.b16 %v304
        %v433 = vunpack.c.l.b16 %v305
        %v434 = vunpack.c.l.b16 %v306
        %v435 = vunpack.c.l.b16 %v307
        %v436 = vunpack.c.l.b16 %v308
        %v437 = vpack.c.b16 %v422, %v421
        %v438 = vpack.c.b16 %v424, %v423
        %v439 = vpack.c.b16 %v426, %v425
        %v440 = vpack.c.b16 %v428, %v427
        %v441 = vpack.c.b16 %v430, %v429
        %v442 = vpack.c.b16 %v432, %v431
        %v443 = vpack.c.b16 %v434, %v433
        %v444 = vpack.c.b16 %v436, %v435
        %453 = vmatprep.subr.bf16.mxu0 0
        %454 = vmatpush1.bf16.msra.mxu0 %v444
        %455 = vmatprep.subr.bf16.mxu0 0
        %456 = vmatpush1.bf16.msra.mxu0 %v443
        %457 = vmatprep.subr.bf16.mxu0 0
        %458 = vmatpush1.bf16.msra.mxu0 %v442
        %459 = vmatprep.subr.bf16.mxu0 0
        %460 = vmatpush1.bf16.msra.mxu0 %v441
        %461 = vmatprep.subr.bf16.mxu0 0
        %462 = vmatpush1.bf16.msra.mxu0 %v440
        %463 = vmatprep.subr.bf16.mxu0 0
        %464 = vmatpush1.bf16.msra.mxu0 %v439
        %465 = vmatprep.subr.bf16.mxu0 0
        %466 = vmatpush1.bf16.msra.mxu0 %v438
        %467 = vmatprep.subr.bf16.mxu0 0
        %468 = vmatpush1.bf16.msra.mxu0 %v437
        %469 = vmatprep.subr.bf16.mxu0 0
        %470 = vmatpush2.bf16.msra.mxu0 0
        %471 = vmatprep.subr.bf16.mxu0 0
        %472 = vmatpush2.bf16.msra.mxu0 0
        %473 = vmatprep.subr.bf16.mxu0 0
        %474 = vmatpush2.bf16.msra.mxu0 0
        %475 = vmatprep.subr.bf16.mxu0 0
        %476 = vmatpush2.bf16.msra.mxu0 0
        %477 = vmatprep.subr.bf16.mxu0 0
        %478 = vmatpush2.bf16.msra.mxu0 0
        %479 = vmatprep.subr.bf16.mxu0 0
        %480 = vmatpush2.bf16.msra.mxu0 0
        %481 = vmatprep.subr.bf16.mxu0 0
        %482 = vmatpush2.bf16.msra.mxu0 0
        %483 = vmatprep.subr.bf16.mxu0 0
        %484 = vmatpush2.bf16.msra.mxu0 0
        %485 = vmatprep.mubr.bf16.mxu0 0
        %486 = vmatmul.mubr.bf16.gmra.mxu0 %v373
        %v487 = vpop.f32.mrf.mxu0
        %v488 = vadd.f32 0.0, %v487
        %v489 = vpop.f32.mrf.mxu0
        %v490 = vpop.f32.mrf.mxu0
        %v491 = vadd.f32 0.0, %v490
        %v492 = vpop.f32.mrf.mxu0
        %493 = vmatprep.mubr.bf16.mxu0 0
        %494 = vmatmul.mubr.bf16.gmra.mxu0 %v374
        %v495 = vpop.f32.mrf.mxu0
        %v496 = vadd.f32 0.0, %v495
        %v497 = vpop.f32.mrf.mxu0
        %v498 = vpop.f32.mrf.mxu0
        %v499 = vadd.f32 0.0, %v498
        %v500 = vpop.f32.mrf.mxu0
        %501 = vmatprep.mubr.bf16.mxu0 0
        %502 = vmatmul.mubr.bf16.gmra.mxu0 %v375
        %v503 = vpop.f32.mrf.mxu0
        %v504 = vadd.f32 0.0, %v503
        %v505 = vpop.f32.mrf.mxu0
        %v506 = vpop.f32.mrf.mxu0
        %v507 = vadd.f32 0.0, %v506
        %v508 = vpop.f32.mrf.mxu0
        %509 = vmatprep.mubr.bf16.mxu0 0
        %510 = vmatmul.mubr.bf16.gmra.mxu0 %v376
        %v511 = vpop.f32.mrf.mxu0
        %v512 = vadd.f32 0.0, %v511
        %v513 = vpop.f32.mrf.mxu0
        %v514 = vpop.f32.mrf.mxu0
        %v515 = vadd.f32 0.0, %v514
        %v516 = vpop.f32.mrf.mxu0
        %517 = vmatprep.mubr.bf16.mxu0 0
        %518 = vmatmul.mubr.bf16.gmra.mxu0 %v377
        %v519 = vpop.f32.mrf.mxu0
        %v520 = vadd.f32 0.0, %v519
        %v521 = vpop.f32.mrf.mxu0
        %v522 = vpop.f32.mrf.mxu0
        %v523 = vadd.f32 0.0, %v522
        %v524 = vpop.f32.mrf.mxu0
        %525 = vmatprep.mubr.bf16.mxu0 0
        %526 = vmatmul.mubr.bf16.gmra.mxu0 %v378
        %v527 = vpop.f32.mrf.mxu0
        %v528 = vadd.f32 0.0, %v527
        %v529 = vpop.f32.mrf.mxu0
        %v530 = vpop.f32.mrf.mxu0
        %v531 = vadd.f32 0.0, %v530
        %v532 = vpop.f32.mrf.mxu0
        %533 = vmatprep.mubr.bf16.mxu0 0
        %534 = vmatmul.mubr.bf16.gmra.mxu0 %v379
        %v535 = vpop.f32.mrf.mxu0
        %v536 = vadd.f32 0.0, %v535
        %v537 = vpop.f32.mrf.mxu0
        %v538 = vpop.f32.mrf.mxu0
        %v539 = vadd.f32 0.0, %v538
        %v540 = vpop.f32.mrf.mxu0
        %541 = vmatprep.mubr.bf16.mxu0 0
        %542 = vmatmul.mubr.bf16.gmra.mxu0 %v380
        %v543 = vpop.f32.mrf.mxu0
        %v544 = vadd.f32 0.0, %v543
        %v545 = vpop.f32.mrf.mxu0
        %v546 = vpop.f32.mrf.mxu0
        %v547 = vadd.f32 0.0, %v546
        %v548 = vpop.f32.mrf.mxu0
        %549 = vmatprep.mubr.bf16.mxu0 0
        %550 = vmatmul.mubr.bf16.gmra.mxu0 %v381
        %v551 = vpop.f32.mrf.mxu0
        %v552 = vadd.f32 0.0, %v551
        %v553 = vpop.f32.mrf.mxu0
        %v554 = vpop.f32.mrf.mxu0
        %v555 = vadd.f32 0.0, %v554
        %v556 = vpop.f32.mrf.mxu0
        %557 = vmatprep.mubr.bf16.mxu0 0
        %558 = vmatmul.mubr.bf16.gmra.mxu0 %v382
        %v559 = vpop.f32.mrf.mxu0
        %v560 = vadd.f32 0.0, %v559
        %v561 = vpop.f32.mrf.mxu0
        %v562 = vpop.f32.mrf.mxu0
        %v563 = vadd.f32 0.0, %v562
        %v564 = vpop.f32.mrf.mxu0
        %565 = vmatprep.mubr.bf16.mxu0 0
        %566 = vmatmul.mubr.bf16.gmra.mxu0 %v383
        %v567 = vpop.f32.mrf.mxu0
        %v568 = vadd.f32 0.0, %v567
        %v569 = vpop.f32.mrf.mxu0
        %v570 = vpop.f32.mrf.mxu0
        %v571 = vadd.f32 0.0, %v570
        %v572 = vpop.f32.mrf.mxu0
        %573 = vmatprep.mubr.bf16.mxu0 0
        %574 = vmatmul.mubr.bf16.gmra.mxu0 %v384
        %v575 = vpop.f32.mrf.mxu0
        %v576 = vadd.f32 0.0, %v575
        %v577 = vpop.f32.mrf.mxu0
        %v578 = vpop.f32.mrf.mxu0
        %v579 = vadd.f32 0.0, %v578
        %v580 = vpop.f32.mrf.mxu0
        %581 = vmatprep.mubr.bf16.mxu0 0
        %582 = vmatmul.mubr.bf16.gmra.mxu0 %v385
        %v583 = vpop.f32.mrf.mxu0
        %v584 = vadd.f32 0.0, %v583
        %v585 = vpop.f32.mrf.mxu0
        %v586 = vpop.f32.mrf.mxu0
        %v587 = vadd.f32 0.0, %v586
        %v588 = vpop.f32.mrf.mxu0
        %589 = vmatprep.mubr.bf16.mxu0 0
        %590 = vmatmul.mubr.bf16.gmra.mxu0 %v386
        %v591 = vpop.f32.mrf.mxu0
        %v592 = vadd.f32 0.0, %v591
        %v593 = vpop.f32.mrf.mxu0
        %v594 = vpop.f32.mrf.mxu0
        %v595 = vadd.f32 0.0, %v594
        %v596 = vpop.f32.mrf.mxu0
        %597 = vmatprep.mubr.bf16.mxu0 0
        %598 = vmatmul.mubr.bf16.gmra.mxu0 %v387
        %v599 = vpop.f32.mrf.mxu0
        %v600 = vadd.f32 0.0, %v599
        %v601 = vpop.f32.mrf.mxu0
        %v602 = vpop.f32.mrf.mxu0
        %v603 = vadd.f32 0.0, %v602
        %v604 = vpop.f32.mrf.mxu0
        %605 = vmatprep.mubr.bf16.mxu0 0
        %606 = vmatmul.mubr.bf16.gmra.mxu0 %v388
        %v607 = vpop.f32.mrf.mxu0
        %v608 = vadd.f32 0.0, %v607
        %v609 = vpop.f32.mrf.mxu0
        %v610 = vpop.f32.mrf.mxu0
        %v611 = vadd.f32 0.0, %v610
        %v612 = vpop.f32.mrf.mxu0
        %613 = vdwg.mxu0
        %v614 = vpack.c.bf16 %v491, %v488
        %v615 = vpack.c.bf16 %v499, %v496
        %v616 = vpack.c.bf16 %v507, %v504
        %v617 = vpack.c.bf16 %v515, %v512
        %v618 = vpack.c.bf16 %v523, %v520
        %v619 = vpack.c.bf16 %v531, %v528
        %v620 = vpack.c.bf16 %v539, %v536
        %v621 = vpack.c.bf16 %v547, %v544
        %v622 = vpack.c.bf16 %v555, %v552
        %v623 = vpack.c.bf16 %v563, %v560
        %v624 = vpack.c.bf16 %v571, %v568
        %v625 = vpack.c.bf16 %v579, %v576
        %v626 = vpack.c.bf16 %v587, %v584
        %v627 = vpack.c.bf16 %v595, %v592
        %v628 = vpack.c.bf16 %v603, %v600
        %v629 = vpack.c.bf16 %v611, %v608
        %v646 = vunpack.c.l.b16 %v614
        %v647 = vunpack.c.h.b16 %v614
        %v648 = vunpack.c.l.b16 %v615
        %v649 = vunpack.c.h.b16 %v615
        %v650 = vunpack.c.l.b16 %v616
        %v651 = vunpack.c.h.b16 %v616
        %v652 = vunpack.c.l.b16 %v617
        %v653 = vunpack.c.h.b16 %v617
        %v654 = vunpack.c.l.b16 %v618
        %v655 = vunpack.c.h.b16 %v618
        %v656 = vunpack.c.l.b16 %v619
        %v657 = vunpack.c.h.b16 %v619
        %v658 = vunpack.c.l.b16 %v620
        %v659 = vunpack.c.h.b16 %v620
        %v660 = vunpack.c.l.b16 %v621
        %v661 = vunpack.c.h.b16 %v621
        %v662 = vunpack.c.l.b16 %v622
        %v663 = vunpack.c.h.b16 %v622
        %v664 = vunpack.c.l.b16 %v623
        %v665 = vunpack.c.h.b16 %v623
        %v666 = vunpack.c.l.b16 %v624
        %v667 = vunpack.c.h.b16 %v624
        %v668 = vunpack.c.l.b16 %v625
        %v669 = vunpack.c.h.b16 %v625
        %v670 = vunpack.c.l.b16 %v626
        %v671 = vunpack.c.h.b16 %v626
        %v672 = vunpack.c.l.b16 %v627
        %v673 = vunpack.c.h.b16 %v627
        %v674 = vunpack.c.l.b16 %v628
        %v675 = vunpack.c.h.b16 %v628
        %v676 = vunpack.c.l.b16 %v629
        %v677 = vunpack.c.h.b16 %v629
        %v678 = vpack.c.b16 %v646, %v646
        %v679 = vpack.c.b16 %v647, %v647
        %v680 = vpack.c.b16 %v648, %v648
        %v681 = vpack.c.b16 %v649, %v649
        %v682 = vpack.c.b16 %v650, %v650
        %v683 = vpack.c.b16 %v651, %v651
        %v684 = vpack.c.b16 %v652, %v652
        %v685 = vpack.c.b16 %v653, %v653
        %v686 = vpack.c.b16 %v654, %v654
        %v687 = vpack.c.b16 %v655, %v655
        %v688 = vpack.c.b16 %v656, %v656
        %v689 = vpack.c.b16 %v657, %v657
        %v690 = vpack.c.b16 %v658, %v658
        %v691 = vpack.c.b16 %v659, %v659
        %v692 = vpack.c.b16 %v660, %v660
        %v693 = vpack.c.b16 %v661, %v661
        %v694 = vpack.c.b16 %v662, %v662
        %v695 = vpack.c.b16 %v663, %v663
        %v696 = vpack.c.b16 %v664, %v664
        %v697 = vpack.c.b16 %v665, %v665
        %v698 = vpack.c.b16 %v666, %v666
        %v699 = vpack.c.b16 %v667, %v667
        %v700 = vpack.c.b16 %v668, %v668
        %v701 = vpack.c.b16 %v669, %v669
        %v702 = vpack.c.b16 %v670, %v670
        %v703 = vpack.c.b16 %v671, %v671
        %v704 = vpack.c.b16 %v672, %v672
        %v705 = vpack.c.b16 %v673, %v673
        %v706 = vpack.c.b16 %v674, %v674
        %v707 = vpack.c.b16 %v675, %v675
        %v708 = vpack.c.b16 %v676, %v676
        %v709 = vpack.c.b16 %v677, %v677
        %742 = vst [vmem:[%s231] sm:$0xf] %v678
        %743 = vst [vmem:[%s231 + $0x4] sm:$0xf] %v679
        %744 = vst [vmem:[%s231 + $0x8] sm:$0xf] %v680
        %745 = vst [vmem:[%s231 + $0xc] sm:$0xf] %v681
        %746 = vst [vmem:[%s231 + $0x10] sm:$0xf] %v682
        %747 = vst [vmem:[%s231 + $0x14] sm:$0xf] %v683
        %748 = vst [vmem:[%s231 + $0x18] sm:$0xf] %v684
        %749 = vst [vmem:[%s231 + $0x1c] sm:$0xf] %v685
        %750 = vst [vmem:[%s231 + $0x20] sm:$0xf] %v686
        %751 = vst [vmem:[%s231 + $0x24] sm:$0xf] %v687
        %752 = vst [vmem:[%s231 + $0x28] sm:$0xf] %v688
        %753 = vst [vmem:[%s231 + $0x2c] sm:$0xf] %v689
        %754 = vst [vmem:[%s231 + $0x30] sm:$0xf] %v690
        %755 = vst [vmem:[%s231 + $0x34] sm:$0xf] %v691
        %756 = vst [vmem:[%s231 + $0x38] sm:$0xf] %v692
        %757 = vst [vmem:[%s231 + $0x3c] sm:$0xf] %v693
        %758 = vst [vmem:[%s231 + $0x40] sm:$0xf] %v694
        %759 = vst [vmem:[%s231 + $0x44] sm:$0xf] %v695
        %760 = vst [vmem:[%s231 + $0x48] sm:$0xf] %v696
        %761 = vst [vmem:[%s231 + $0x4c] sm:$0xf] %v697
        %762 = vst [vmem:[%s231 + $0x50] sm:$0xf] %v698
        %763 = vst [vmem:[%s231 + $0x54] sm:$0xf] %v699
        %764 = vst [vmem:[%s231 + $0x58] sm:$0xf] %v700
        %765 = vst [vmem:[%s231 + $0x5c] sm:$0xf] %v701
        %766 = vst [vmem:[%s231 + $0x60] sm:$0xf] %v702
        %767 = vst [vmem:[%s231 + $0x64] sm:$0xf] %v703
        %768 = vst [vmem:[%s231 + $0x68] sm:$0xf] %v704
        %769 = vst [vmem:[%s231 + $0x6c] sm:$0xf] %v705
        %770 = vst [vmem:[%s231 + $0x70] sm:$0xf] %v706
        %771 = vst [vmem:[%s231 + $0x74] sm:$0xf] %v707
        %772 = vst [vmem:[%s231 + $0x78] sm:$0xf] %v708
        %773 = vst [vmem:[%s231 + $0x7c] sm:$0xf] %v709
        %806 = vrot.lane.b32.xlu0 %v488, 80
        %v807 = vpop.permute.xlu0 %806
        %808 = vrot.lane.b32.xlu0 %v491, 80
        %v809 = vpop.permute.xlu0 %808
        %810 = vrot.lane.b32.xlu0 %v496, 80
        %v811 = vpop.permute.xlu0 %810
        %812 = vrot.lane.b32.xlu0 %v499, 80
        %v813 = vpop.permute.xlu0 %812
        %814 = vrot.lane.b32.xlu0 %v504, 80
        %v815 = vpop.permute.xlu0 %814
        %816 = vrot.lane.b32.xlu0 %v507, 80
        %v817 = vpop.permute.xlu0 %816
        %818 = vrot.lane.b32.xlu0 %v512, 80
        %v819 = vpop.permute.xlu0 %818
        %820 = vrot.lane.b32.xlu0 %v515, 80
        %v821 = vpop.permute.xlu0 %820
        %822 = vrot.lane.b32.xlu0 %v520, 80
        %v823 = vpop.permute.xlu0 %822
        %824 = vrot.lane.b32.xlu0 %v523, 80
        %v825 = vpop.permute.xlu0 %824
        %826 = vrot.lane.b32.xlu0 %v528, 80
        %v827 = vpop.permute.xlu0 %826
        %828 = vrot.lane.b32.xlu0 %v531, 80
        %v829 = vpop.permute.xlu0 %828
        %830 = vrot.lane.b32.xlu0 %v536, 80
        %v831 = vpop.permute.xlu0 %830
        %832 = vrot.lane.b32.xlu0 %v539, 80
        %v833 = vpop.permute.xlu0 %832
        %834 = vrot.lane.b32.xlu0 %v544, 80
        %v835 = vpop.permute.xlu0 %834
        %836 = vrot.lane.b32.xlu0 %v547, 80
        %v837 = vpop.permute.xlu0 %836
        %838 = vrot.lane.b32.xlu0 %v552, 80
        %v839 = vpop.permute.xlu0 %838
        %840 = vrot.lane.b32.xlu0 %v555, 80
        %v841 = vpop.permute.xlu0 %840
        %842 = vrot.lane.b32.xlu0 %v560, 80
        %v843 = vpop.permute.xlu0 %842
        %844 = vrot.lane.b32.xlu0 %v563, 80
        %v845 = vpop.permute.xlu0 %844
        %846 = vrot.lane.b32.xlu0 %v568, 80
        %v847 = vpop.permute.xlu0 %846
        %848 = vrot.lane.b32.xlu0 %v571, 80
        %v849 = vpop.permute.xlu0 %848
        %850 = vrot.lane.b32.xlu0 %v576, 80
        %v851 = vpop.permute.xlu0 %850
        %852 = vrot.lane.b32.xlu0 %v579, 80
        %v853 = vpop.permute.xlu0 %852
        %854 = vrot.lane.b32.xlu0 %v584, 80
        %v855 = vpop.permute.xlu0 %854
        %856 = vrot.lane.b32.xlu0 %v587, 80
        %v857 = vpop.permute.xlu0 %856
        %858 = vrot.lane.b32.xlu0 %v592, 80
        %v859 = vpop.permute.xlu0 %858
        %860 = vrot.lane.b32.xlu0 %v595, 80
        %v861 = vpop.permute.xlu0 %860
        %862 = vrot.lane.b32.xlu0 %v600, 80
        %v863 = vpop.permute.xlu0 %862
        %864 = vrot.lane.b32.xlu0 %v603, 80
        %v865 = vpop.permute.xlu0 %864
        %866 = vrot.lane.b32.xlu0 %v608, 80
        %v867 = vpop.permute.xlu0 %866
        %868 = vrot.lane.b32.xlu0 %v611, 80
        %v869 = vpop.permute.xlu0 %868
        %vm902 = vcmask 7168
        %903 = vst.msk [vmem:[%s252] sm:$0xff] %vm902, %v807
        %904 = vst.msk [vmem:[%s252 + $0x8] sm:$0xff] %vm902, %v809
        %905 = vst.msk [vmem:[%s252 + $0x10] sm:$0xff] %vm902, %v811
        %906 = vst.msk [vmem:[%s252 + $0x18] sm:$0xff] %vm902, %v813
        %907 = vst.msk [vmem:[%s252 + $0x20] sm:$0xff] %vm902, %v815
        %908 = vst.msk [vmem:[%s252 + $0x28] sm:$0xff] %vm902, %v817
        %909 = vst.msk [vmem:[%s252 + $0x30] sm:$0xff] %vm902, %v819
        %910 = vst.msk [vmem:[%s252 + $0x38] sm:$0xff] %vm902, %v821
        %911 = vst.msk [vmem:[%s252 + $0x40] sm:$0xff] %vm902, %v823
        %912 = vst.msk [vmem:[%s252 + $0x48] sm:$0xff] %vm902, %v825
        %913 = vst.msk [vmem:[%s252 + $0x50] sm:$0xff] %vm902, %v827
        %914 = vst.msk [vmem:[%s252 + $0x58] sm:$0xff] %vm902, %v829
        %915 = vst.msk [vmem:[%s252 + $0x60] sm:$0xff] %vm902, %v831
        %916 = vst.msk [vmem:[%s252 + $0x68] sm:$0xff] %vm902, %v833
        %917 = vst.msk [vmem:[%s252 + $0x70] sm:$0xff] %vm902, %v835
        %918 = vst.msk [vmem:[%s252 + $0x78] sm:$0xff] %vm902, %v837
        %919 = vst.msk [vmem:[%s252 + $0x80] sm:$0xff] %vm902, %v839
        %920 = vst.msk [vmem:[%s252 + $0x88] sm:$0xff] %vm902, %v841
        %921 = vst.msk [vmem:[%s252 + $0x90] sm:$0xff] %vm902, %v843
        %922 = vst.msk [vmem:[%s252 + $0x98] sm:$0xff] %vm902, %v845
        %923 = vst.msk [vmem:[%s252 + $0xa0] sm:$0xff] %vm902, %v847
        %924 = vst.msk [vmem:[%s252 + $0xa8] sm:$0xff] %vm902, %v849
        %925 = vst.msk [vmem:[%s252 + $0xb0] sm:$0xff] %vm902, %v851
        %926 = vst.msk [vmem:[%s252 + $0xb8] sm:$0xff] %vm902, %v853
        %927 = vst.msk [vmem:[%s252 + $0xc0] sm:$0xff] %vm902, %v855
        %928 = vst.msk [vmem:[%s252 + $0xc8] sm:$0xff] %vm902, %v857
        %929 = vst.msk [vmem:[%s252 + $0xd0] sm:$0xff] %vm902, %v859
        %930 = vst.msk [vmem:[%s252 + $0xd8] sm:$0xff] %vm902, %v861
        %931 = vst.msk [vmem:[%s252 + $0xe0] sm:$0xff] %vm902, %v863
        %932 = vst.msk [vmem:[%s252 + $0xe8] sm:$0xff] %vm902, %v865
        %933 = vst.msk [vmem:[%s252 + $0xf0] sm:$0xff] %vm902, %v867
        %934 = vst.msk [vmem:[%s252 + $0xf8] sm:$0xff] %vm902, %v869
        %935 = vrot.lane.b32.xlu0 %v488, 79
        %v936 = vpop.permute.xlu0 %935
        %937 = vrot.lane.b32.xlu0 %v491, 79
        %v938 = vpop.permute.xlu0 %937
        %939 = vrot.lane.b32.xlu0 %v496, 79
        %v940 = vpop.permute.xlu0 %939
        %941 = vrot.lane.b32.xlu0 %v499, 79
        %v942 = vpop.permute.xlu0 %941
        %943 = vrot.lane.b32.xlu0 %v504, 79
        %v944 = vpop.permute.xlu0 %943
        %945 = vrot.lane.b32.xlu0 %v507, 79
        %v946 = vpop.permute.xlu0 %945
        %947 = vrot.lane.b32.xlu0 %v512, 79
        %v948 = vpop.permute.xlu0 %947
        %949 = vrot.lane.b32.xlu0 %v515, 79
        %v950 = vpop.permute.xlu0 %949
        %951 = vrot.lane.b32.xlu0 %v520, 79
        %v952 = vpop.permute.xlu0 %951
        %953 = vrot.lane.b32.xlu0 %v523, 79
        %v954 = vpop.permute.xlu0 %953
        %955 = vrot.lane.b32.xlu0 %v528, 79
        %v956 = vpop.permute.xlu0 %955
        %957 = vrot.lane.b32.xlu0 %v531, 79
        %v958 = vpop.permute.xlu0 %957
        %959 = vrot.lane.b32.xlu0 %v536, 79
        %v960 = vpop.permute.xlu0 %959
        %961 = vrot.lane.b32.xlu0 %v539, 79
        %v962 = vpop.permute.xlu0 %961
        %963 = vrot.lane.b32.xlu0 %v544, 79
        %v964 = vpop.permute.xlu0 %963
        %965 = vrot.lane.b32.xlu0 %v547, 79
        %v966 = vpop.permute.xlu0 %965
        %967 = vrot.lane.b32.xlu0 %v552, 79
        %v968 = vpop.permute.xlu0 %967
        %969 = vrot.lane.b32.xlu0 %v555, 79
        %v970 = vpop.permute.xlu0 %969
        %971 = vrot.lane.b32.xlu0 %v560, 79
        %v972 = vpop.permute.xlu0 %971
        %973 = vrot.lane.b32.xlu0 %v563, 79
        %v974 = vpop.permute.xlu0 %973
        %975 = vrot.lane.b32.xlu0 %v568, 79
        %v976 = vpop.permute.xlu0 %975
        %977 = vrot.lane.b32.xlu0 %v571, 79
        %v978 = vpop.permute.xlu0 %977
        %979 = vrot.lane.b32.xlu0 %v576, 79
        %v980 = vpop.permute.xlu0 %979
        %981 = vrot.lane.b32.xlu0 %v579, 79
        %v982 = vpop.permute.xlu0 %981
        %983 = vrot.lane.b32.xlu0 %v584, 79
        %v984 = vpop.permute.xlu0 %983
        %985 = vrot.lane.b32.xlu0 %v587, 79
        %v986 = vpop.permute.xlu0 %985
        %987 = vrot.lane.b32.xlu0 %v592, 79
        %v988 = vpop.permute.xlu0 %987
        %989 = vrot.lane.b32.xlu0 %v595, 79
        %v990 = vpop.permute.xlu0 %989
        %991 = vrot.lane.b32.xlu0 %v600, 79
        %v992 = vpop.permute.xlu0 %991
        %993 = vrot.lane.b32.xlu0 %v603, 79
        %v994 = vpop.permute.xlu0 %993
        %995 = vrot.lane.b32.xlu0 %v608, 79
        %v996 = vpop.permute.xlu0 %995
        %997 = vrot.lane.b32.xlu0 %v611, 79
        %v998 = vpop.permute.xlu0 %997
        %1031 = vst.msk [vmem:[%s258] sm:$0xff] %vm902, %v936
        %1032 = vst.msk [vmem:[%s258 + $0x8] sm:$0xff] %vm902, %v938
        %1033 = vst.msk [vmem:[%s258 + $0x10] sm:$0xff] %vm902, %v940
        %1034 = vst.msk [vmem:[%s258 + $0x18] sm:$0xff] %vm902, %v942
        %1035 = vst.msk [vmem:[%s258 + $0x20] sm:$0xff] %vm902, %v944
        %1036 = vst.msk [vmem:[%s258 + $0x28] sm:$0xff] %vm902, %v946
        %1037 = vst.msk [vmem:[%s258 + $0x30] sm:$0xff] %vm902, %v948
        %1038 = vst.msk [vmem:[%s258 + $0x38] sm:$0xff] %vm902, %v950
        %1039 = vst.msk [vmem:[%s258 + $0x40] sm:$0xff] %vm902, %v952
        %1040 = vst.msk [vmem:[%s258 + $0x48] sm:$0xff] %vm902, %v954
        %1041 = vst.msk [vmem:[%s258 + $0x50] sm:$0xff] %vm902, %v956
        %1042 = vst.msk [vmem:[%s258 + $0x58] sm:$0xff] %vm902, %v958
        %1043 = vst.msk [vmem:[%s258 + $0x60] sm:$0xff] %vm902, %v960
        %1044 = vst.msk [vmem:[%s258 + $0x68] sm:$0xff] %vm902, %v962
        %1045 = vst.msk [vmem:[%s258 + $0x70] sm:$0xff] %vm902, %v964
        %1046 = vst.msk [vmem:[%s258 + $0x78] sm:$0xff] %vm902, %v966
        %1047 = vst.msk [vmem:[%s258 + $0x80] sm:$0xff] %vm902, %v968
        %1048 = vst.msk [vmem:[%s258 + $0x88] sm:$0xff] %vm902, %v970
        %1049 = vst.msk [vmem:[%s258 + $0x90] sm:$0xff] %vm902, %v972
        %1050 = vst.msk [vmem:[%s258 + $0x98] sm:$0xff] %vm902, %v974
        %1051 = vst.msk [vmem:[%s258 + $0xa0] sm:$0xff] %vm902, %v976
        %1052 = vst.msk [vmem:[%s258 + $0xa8] sm:$0xff] %vm902, %v978
        %1053 = vst.msk [vmem:[%s258 + $0xb0] sm:$0xff] %vm902, %v980
        %1054 = vst.msk [vmem:[%s258 + $0xb8] sm:$0xff] %vm902, %v982
        %1055 = vst.msk [vmem:[%s258 + $0xc0] sm:$0xff] %vm902, %v984
        %1056 = vst.msk [vmem:[%s258 + $0xc8] sm:$0xff] %vm902, %v986
        %1057 = vst.msk [vmem:[%s258 + $0xd0] sm:$0xff] %vm902, %v988
        %1058 = vst.msk [vmem:[%s258 + $0xd8] sm:$0xff] %vm902, %v990
        %1059 = vst.msk [vmem:[%s258 + $0xe0] sm:$0xff] %vm902, %v992
        %1060 = vst.msk [vmem:[%s258 + $0xe8] sm:$0xff] %vm902, %v994
        %1061 = vst.msk [vmem:[%s258 + $0xf0] sm:$0xff] %vm902, %v996
        %1062 = vst.msk [vmem:[%s258 + $0xf8] sm:$0xff] %vm902, %v998
        %s1063 = sand.u32 %s78, 1
        %s1064 = scalar_lea.sflag [#allocation4], %s1063
        %s1065 = sand.u32 %s78, 1
        %s1066 = smul.addr %s1065, 128
        %s1067 = scalar_lea.vmem [#allocation7], %s1066
        %s1068 = smul.u32 32, %s23
        %p1069 = scmp.lt.s32.totalorder %s1068, 63
        %s1070 = scalar_select %p1069, %s1068, 63
        %s1071 = smul.addr %s1070, 8
        %s1072 = scalar_lea.vmem %s3, %s1071
        %s1073 = smul.u32 32, %s23
        %p1074 = scmp.lt.s32.totalorder %s1073, 63
        %s1075 = scalar_select %p1074, %s1073, 63
        %s1076 = smul.addr %s1075, 8
        %s1077 = scalar_lea.vmem %s4, %s1076
        // Predicated region
        $region37: #{tpu_custom_call.1} parent=27 // pred_check
          %p1078 = pneg %p88
        $region38: #{tpu_custom_call.1} parent=27 // pred_check_branch
          %1080 = sbr.rel (%p1078) target = $region40
        $region39: #{tpu_custom_call.1} parent=27 // pred_region
          %s1081 = smul.u32 32, %s23
          %s1083 = ssub.s32 2048, 2048
          %1084 = vsyncadd %s1064, %s1083
          %s1085 = smul.addr %s1081, 64
          %s1086 = scalar_lea.hbm %s2, %s1085
          %s1087 = sshll.u32 %s1067, 4
          %s1088 = int_to_ptr.vmem [resolvable:$true] %s1087
          %1093 = dma.vmem_to_hbm [thread:$0]  %s1088, 2048, %s1086, %s1064, 64, 64, 4
        $region40: #{tpu_custom_call.1} parent=27 // pred_fallthru
          _
        // Predicated region
        $region41: #{tpu_custom_call.1} parent=27 // pred_check
          %p1094 = pneg %p114
        $region42: #{tpu_custom_call.1} parent=27 // pred_check_branch
          %1096 = sbr.rel (%p1094) target = $region44
        $region43: #{tpu_custom_call.1} parent=27 // pred_region
          %s1097 = smul.u32 32, %s23
        $region44: #{tpu_custom_call.1} parent=27 // pred_fallthru
          _
        // Predicated region
        $region45: #{tpu_custom_call.1} parent=27 // pred_check
          %p1098 = pneg %p140
        $region46: #{tpu_custom_call.1} parent=27 // pred_check_branch
          %1100 = sbr.rel (%p1098) target = $region48
        $region47: #{tpu_custom_call.1} parent=27 // pred_region
          %s1101 = smul.u32 32, %s23
        $region48: #{tpu_custom_call.1} parent=27 // pred_fallthru
          _
      $region28: #{tpu_custom_call.1} parent=5 // pred_fallthru
        _
      %p1102 = scmp.le.s32.totalorder 2, %s18
      // Predicated region
      $region49: #{tpu_custom_call.1} parent=5 // pred_check
        %p1103 = pneg %p1102
      $region50: #{tpu_custom_call.1} parent=5 // pred_check_branch
        %1105 = sbr.rel (%p1103) target = $region52
      $region51: #{tpu_custom_call.1} parent=5 // pred_region
        %s1106 = ssub.s32 %s18, 2
        // Predicated region
        $region53: #{tpu_custom_call.1} parent=51 // pred_check
          %p1107 = pneg %p94
        $region54: #{tpu_custom_call.1} parent=51 // pred_check_branch
          %1109 = sbr.rel (%p1107) target = $region56
        $region55: #{tpu_custom_call.1} parent=51 // pred_region
          %s1110 = sand.u32 %s79, 1
          %s1111 = scalar_lea.sflag [#allocation4], %s1110
          %s1112 = sand.u32 %s79, 1
          %s1113 = smul.addr %s1112, 128
          %s1114 = scalar_lea.vmem [#allocation7], %s1113
          %1115 = dma.done %s1111, 2048
        $region56: #{tpu_custom_call.1} parent=51 // pred_fallthru
          _
        // Predicated region
        $region57: #{tpu_custom_call.1} parent=51 // pred_check
          %p1116 = pneg %p120
        $region58: #{tpu_custom_call.1} parent=51 // pred_check_branch
          %1118 = sbr.rel (%p1116) target = $region60
        $region59: #{tpu_custom_call.1} parent=51 // pred_region
          %s1119 = smul.u32 32, %s24
          %p1120 = scmp.lt.s32.totalorder %s1119, 63
          %s1121 = scalar_select %p1120, %s1119, 63
          %s1122 = smul.addr %s1121, 8
          %s1123 = scalar_lea.vmem %s3, %s1122
        $region60: #{tpu_custom_call.1} parent=51 // pred_fallthru
          _
        // Predicated region
        $region61: #{tpu_custom_call.1} parent=51 // pred_check
          %p1124 = pneg %p146
        $region62: #{tpu_custom_call.1} parent=51 // pred_check_branch
          %1126 = sbr.rel (%p1124) target = $region64
        $region63: #{tpu_custom_call.1} parent=51 // pred_region
          %s1127 = smul.u32 32, %s24
          %p1128 = scmp.lt.s32.totalorder %s1127, 63
          %s1129 = scalar_select %p1128, %s1127, 63
          %s1130 = smul.addr %s1129, 8
          %s1131 = scalar_lea.vmem %s4, %s1130
        $region64: #{tpu_custom_call.1} parent=51 // pred_fallthru
          _
      $region52: #{tpu_custom_call.1} parent=5 // pred_fallthru
        _
    $region6: #{tpu_custom_call.1} parent=1 // loop_footer
      %s22 = sadd.s32 1, %s18
    $region7: #{tpu_custom_call.1} parent=1 // loop_footer_branch
      %17 = sbr.rel target = $region3
    $region8: #{tpu_custom_call.1} parent=1 // loop_exit
      _
    %1132 = vsyncpa [#allocation3], 1
    %s1133 = scalar_lea.sflag [#allocation3], 1
    %1134 = vsyncpa %s1133, 1
    %1135 = vsyncpa [#allocation6], 1
    %1136 = vsyncpa [#allocation4], 1
    %s1137 = scalar_lea.sflag [#allocation4], 1
    %1138 = vsyncpa %s1137, 1

</llo_original>
